<compile_context>
chip_gen: v7x
topology: tpu7x:2x2x1
jax: 0.10.0
libtpu: 0.0.40
codegen_flags: <defaults>
</compile_context>

<pallas_src>
import jax
import jax.numpy as jnp
from jax.experimental import pallas as pl
from jax.experimental.pallas import tpu as pltpu

HIDDEN_DIM = 32
PF_DIM = 64
BATCH = 2
SEQ = 8
DROPOUT_RATIO = 0.1   # TODO(synk): dropout is identity here (eval-mode semantics); no PRNG drop mask applied.
NEG_SLOPE = 0.01      # nn.LeakyReLU() default negative_slope

LANE = 128            # TPU vreg lane width
ROW_TILE_MAX = 256    # row tile for the parallel grid when B*S grows beyond toy size


def _round_up(a, b):
    return -(-a // b) * b


def _ffn_kernel(x_ref, w1_ref, b1_ref, w2_ref, b2_ref, out_ref):
    # x tile: (tile_n, H) f32 -> bf16 for the MXU (cast is a free VPU op, keeps x DMA at f32).
    x = x_ref[...].astype(jnp.bfloat16)

    # fc_1: x @ W1t_pad  (bf16 operands, f32 MXU accumulation), bias + LeakyReLU in f32.
    h = jnp.dot(x, w1_ref[...], preferred_element_type=jnp.float32)      # (tile_n, P_pad) f32
    h = h + b1_ref[...]
    h = jnp.where(h > 0, h, NEG_SLOPE * h)                               # LeakyReLU (VPU, f32)
    # dropout(h) is identity in eval mode.

    # fc_2: h @ W2t_pad  (bf16 operands, f32 MXU accumulation), bias + LeakyReLU in f32.
    y = jnp.dot(h.astype(jnp.bfloat16), w2_ref[...],
                preferred_element_type=jnp.float32)                      # (tile_n, H_pad) f32
    y = y + b2_ref[...]
    y = jnp.where(y > 0, y, NEG_SLOPE * y)                               # LeakyReLU (VPU, f32)

    # Lane-dense (tile_n, 128) unmasked store.
    out_ref[...] = y.astype(out_ref.dtype)


def prepare_params(params, hidden_dim, pf_dim):
    """One-time (init-time) layout prep: transpose, zero-pad to 128 lanes, cast weights to bf16.

    PyTorch-style params in: W1 (P, H), b1 (P,), W2 (H, P), b2 (H,).
    Returns: W1t_pad (H, P_pad) bf16, b1_pad (1, P_pad) f32, W2t_pad (P_pad, H_pad) bf16, b2_pad (1, H_pad) f32.
    Zero padding keeps the padded columns/rows mathematically inert (LeakyReLU(0) == 0).
    """
    w1, b1, w2, b2 = params
    p_pad = _round_up(pf_dim, LANE)
    h_pad = _round_up(hidden_dim, LANE)

    w1t = jnp.zeros((hidden_dim, p_pad), jnp.bfloat16).at[:, :pf_dim].set(w1.T.astype(jnp.bfloat16))
    b1p = jnp.zeros((1, p_pad), jnp.float32).at[:, :pf_dim].set(b1.astype(jnp.float32))
    w2t = jnp.zeros((p_pad, h_pad), jnp.bfloat16).at[:pf_dim, :hidden_dim].set(w2.T.astype(jnp.bfloat16))
    b2p = jnp.zeros((1, h_pad), jnp.float32).at[:, :hidden_dim].set(b2.astype(jnp.float32))
    return w1t, b1p, w2t, b2p


def positionwise_feedforward(x, prepared_params, *, interpret=False):
    """x: (B, S, H) float32. prepared_params: output of prepare_params (pre-transposed/padded/bf16)."""
    B, S, H = x.shape
    w1t, b1p, w2t, b2p = prepared_params
    p_pad = w1t.shape[1]
    h_pad = w2t.shape[1]

    n = B * S
    x2d = x.reshape(n, H)                       # row-major reshape, no data movement

    # Row tiling: whole batch as one tile when small; otherwise 256-row tiles sharded
    # across TensorCores via the "parallel" grid axis (v7x has 2 TCs).
    n_pad = _round_up(n, 8)
    if n_pad > ROW_TILE_MAX:
        row_tile = ROW_TILE_MAX
        n_pad = _round_up(n, row_tile)
    else:
        row_tile = n_pad
    if n_pad != n:
        x2d = jnp.pad(x2d, ((0, n_pad - n), (0, 0)))
    grid = (n_pad // row_tile,)

    flops = 2 * n_pad * (H * p_pad + p_pad * h_pad)
    bytes_accessed = int(x2d.size * x2d.dtype.itemsize
                         + w1t.size * 2 + w2t.size * 2
                         + b1p.size * 4 + b2p.size * 4
                         + n_pad * h_pad * 4)

    out2d = pl.pallas_call(
        _ffn_kernel,
        out_shape=jax.ShapeDtypeStruct((n_pad, h_pad), jnp.float32),
        grid=grid,
        in_specs=[
            pl.BlockSpec((row_tile, H), lambda i: (i, 0),
                         memory_space=pltpu.MemorySpace.VMEM),           # x rows
            pl.BlockSpec((H, p_pad), lambda i: (0, 0),
                         memory_space=pltpu.MemorySpace.VMEM),           # W1t (resident)
            pl.BlockSpec((1, p_pad), lambda i: (0, 0),
                         memory_space=pltpu.MemorySpace.VMEM),           # b1  (resident)
            pl.BlockSpec((p_pad, h_pad), lambda i: (0, 0),
                         memory_space=pltpu.MemorySpace.VMEM),           # W2t (resident)
            pl.BlockSpec((1, h_pad), lambda i: (0, 0),
                         memory_space=pltpu.MemorySpace.VMEM),           # b2  (resident)
        ],
        out_specs=pl.BlockSpec((row_tile, h_pad), lambda i: (i, 0),
                               memory_space=pltpu.MemorySpace.VMEM),     # lane-dense output slab
        compiler_params=pltpu.CompilerParams(dimension_semantics=("parallel",)),
        cost_estimate=pl.CostEstimate(flops=flops, transcendentals=0,
                                      bytes_accessed=bytes_accessed),
        interpret=interpret,
    )(x2d, w1t, b1p, w2t, b2p)

    # Strip the lane/row padding (cheap XLA slice; in a fused encoder the consumer
    # would take the padded slab directly).
    return out2d[:n, :H].reshape(B, S, H)


def init_params(key, hidden_dim, pf_dim):
    # Deterministic PyTorch-Linear-style init: U(-1/sqrt(fan_in), 1/sqrt(fan_in)).
    k1, k2, k3, k4 = jax.random.split(key, 4)

    bound1 = 1.0 / jnp.sqrt(jnp.float32(hidden_dim))
    w1 = jax.random.uniform(k1, (pf_dim, hidden_dim), jnp.float32, minval=-bound1, maxval=bound1)
    b1 = jax.random.uniform(k2, (pf_dim,), jnp.float32, minval=-bound1, maxval=bound1)

    bound2 = 1.0 / jnp.sqrt(jnp.float32(pf_dim))
    w2 = jax.random.uniform(k3, (hidden_dim, pf_dim), jnp.float32, minval=-bound2, maxval=bound2)
    b2 = jax.random.uniform(k4, (hidden_dim,), jnp.float32, minval=-bound2, maxval=bound2)

    return w1, b1, w2, b2


def reference(x, params):
    # Pure-f32 PyTorch-faithful reference.
    w1, b1, w2, b2 = params
    h = x @ w1.T + b1
    h = jnp.where(h > 0, h, NEG_SLOPE * h)
    y = h @ w2.T + b2
    y = jnp.where(y > 0, y, NEG_SLOPE * y)
    return y


if __name__ == "__main__":
    root = jax.random.PRNGKey(0)
    k_param, k_x = jax.random.split(root, 2)

    params = init_params(k_param, HIDDEN_DIM, PF_DIM)
    prepared = prepare_params(params, HIDDEN_DIM, PF_DIM)   # one-time layout prep
    x = jax.random.normal(k_x, (BATCH, SEQ, HIDDEN_DIM), jnp.float32)

    out = positionwise_feedforward(x, prepared)
    out = jax.block_until_ready(out)

    ref_out = reference(x, params)
    assert out.shape == (BATCH, SEQ, HIDDEN_DIM)
    # Tolerance loosened for bf16 matmul operands (f32 accumulation on the MXU).
    assert jnp.allclose(out, ref_out, atol=5e-2, rtol=5e-2), float(jnp.max(jnp.abs(out - ref_out)))

    print("KERNEL_OK")
</pallas_src>

<mosaic_0001>
module attributes {stable_mosaic.version = 11 : i64} {
  func.func @_ffn_kernel(%arg0: i32, %arg1: memref<16x32xf32, #tpu.memory_space<vmem>>, %arg2: memref<32x128xbf16, #tpu.memory_space<vmem>>, %arg3: memref<1x128xf32, #tpu.memory_space<vmem>>, %arg4: memref<128x128xbf16, #tpu.memory_space<vmem>>, %arg5: memref<1x128xf32, #tpu.memory_space<vmem>>, %arg6: memref<16x128xf32, #tpu.memory_space<vmem>>) attributes {dimension_semantics = [#tpu.dimension_semantics<parallel>], iteration_bounds = array<i64: 1>, scalar_prefetch = 0 : i64, scratch_operands = 0 : i64, tpu.core_type = #tpu.core_type<tc>, window_params = [{transform_indices = @transform_0, window_bounds = array<i64: 16, 32>}, {pipeline_mode = #tpu.pipeline_mode<synchronous>, transform_indices = @transform_1, window_bounds = array<i64: 32, 128>}, {pipeline_mode = #tpu.pipeline_mode<synchronous>, transform_indices = @transform_2, window_bounds = array<i64: 1, 128>}, {pipeline_mode = #tpu.pipeline_mode<synchronous>, transform_indices = @transform_3, window_bounds = array<i64: 128, 128>}, {pipeline_mode = #tpu.pipeline_mode<synchronous>, transform_indices = @transform_4, window_bounds = array<i64: 1, 128>}, {transform_indices = @transform_5, window_bounds = array<i64: 16, 128>}]} {
    %c0 = arith.constant 0 : index
    %c0_0 = arith.constant 0 : index
    %0 = vector.load %arg1[%c0, %c0_0] : memref<16x32xf32, #tpu.memory_space<vmem>>, vector<16x32xf32>
    %1 = arith.truncf %0 : vector<16x32xf32> to vector<16x32xbf16>
    %c0_1 = arith.constant 0 : index
    %c0_2 = arith.constant 0 : index
    %2 = vector.load %arg2[%c0_1, %c0_2] : memref<32x128xbf16, #tpu.memory_space<vmem>>, vector<32x128xbf16>
    %cst = arith.constant dense<0.000000e+00> : vector<16x128xf32>
    %3 = tpu.matmul %1, %2, %cst {dimension_numbers = #tpu.dot_dimension_numbers<[1], [0], [0], [1], [0, 0, 1, 1], [], []>} : vector<16x32xbf16>, vector<32x128xbf16>, vector<16x128xf32> -> vector<16x128xf32>
    %c0_3 = arith.constant 0 : index
    %c0_4 = arith.constant 0 : index
    %4 = vector.load %arg3[%c0_3, %c0_4] : memref<1x128xf32, #tpu.memory_space<vmem>>, vector<1x128xf32>
    %5 = vector.broadcast %4 : vector<1x128xf32> to vector<16x128xf32>
    %6 = arith.addf %3, %5 : vector<16x128xf32>
    %cst_5 = arith.constant 0.000000e+00 : f32
    %7 = vector.broadcast %cst_5 : f32 to vector<16x128xf32>
    %8 = arith.cmpf ogt, %6, %7 : vector<16x128xf32>
    %cst_6 = arith.constant 0.00999999977 : f32
    %9 = vector.broadcast %cst_6 : f32 to vector<16x128xf32>
    %10 = arith.mulf %9, %6 : vector<16x128xf32>
    %11 = arith.select %8, %6, %10 : vector<16x128xi1>, vector<16x128xf32>
    %12 = arith.truncf %11 : vector<16x128xf32> to vector<16x128xbf16>
    %c0_7 = arith.constant 0 : index
    %c0_8 = arith.constant 0 : index
    %13 = vector.load %arg4[%c0_7, %c0_8] : memref<128x128xbf16, #tpu.memory_space<vmem>>, vector<128x128xbf16>
    %cst_9 = arith.constant dense<0.000000e+00> : vector<16x128xf32>
    %14 = tpu.matmul %12, %13, %cst_9 {dimension_numbers = #tpu.dot_dimension_numbers<[1], [0], [0], [1], [0, 0, 1, 1], [], []>} : vector<16x128xbf16>, vector<128x128xbf16>, vector<16x128xf32> -> vector<16x128xf32>
    %c0_10 = arith.constant 0 : index
    %c0_11 = arith.constant 0 : index
    %15 = vector.load %arg5[%c0_10, %c0_11] : memref<1x128xf32, #tpu.memory_space<vmem>>, vector<1x128xf32>
    %16 = vector.broadcast %15 : vector<1x128xf32> to vector<16x128xf32>
    %17 = arith.addf %14, %16 : vector<16x128xf32>
    %cst_12 = arith.constant 0.000000e+00 : f32
    %18 = vector.broadcast %cst_12 : f32 to vector<16x128xf32>
    %19 = arith.cmpf ogt, %17, %18 : vector<16x128xf32>
    %cst_13 = arith.constant 0.00999999977 : f32
    %20 = vector.broadcast %cst_13 : f32 to vector<16x128xf32>
    %21 = arith.mulf %20, %17 : vector<16x128xf32>
    %22 = arith.select %19, %17, %21 : vector<16x128xi1>, vector<16x128xf32>
    %c0_14 = arith.constant 0 : index
    %c0_15 = arith.constant 0 : index
    %23 = vector.load %arg6[%c0_14, %c0_15] : memref<16x128xf32, #tpu.memory_space<vmem>>, vector<16x128xf32>
    tpu.vector_store %arg6[%c0_14, %c0_15], %22 {strides = array<i32>} : memref<16x128xf32, #tpu.memory_space<vmem>>, vector<16x128xf32>,
    return
  }
  func.func @transform_0(%arg0: i32) -> (i32, i32) {
    %c0_i32 = arith.constant 0 : i32
    %c0_i32_0 = arith.constant 0 : i32
    return %arg0, %c0_i32 : i32, i32
  }
  func.func @transform_1(%arg0: i32) -> (i32, i32) {
    %c0_i32 = arith.constant 0 : i32
    %c0_i32_0 = arith.constant 0 : i32
    %c0_i32_1 = arith.constant 0 : i32
    return %c0_i32, %c0_i32_0 : i32, i32
  }
  func.func @transform_2(%arg0: i32) -> (i32, i32) {
    %c0_i32 = arith.constant 0 : i32
    %c0_i32_0 = arith.constant 0 : i32
    %c0_i32_1 = arith.constant 0 : i32
    return %c0_i32, %c0_i32_0 : i32, i32
  }
  func.func @transform_3(%arg0: i32) -> (i32, i32) {
    %c0_i32 = arith.constant 0 : i32
    %c0_i32_0 = arith.constant 0 : i32
    %c0_i32_1 = arith.constant 0 : i32
    return %c0_i32, %c0_i32_0 : i32, i32
  }
  func.func @transform_4(%arg0: i32) -> (i32, i32) {
    %c0_i32 = arith.constant 0 : i32
    %c0_i32_0 = arith.constant 0 : i32
    %c0_i32_1 = arith.constant 0 : i32
    return %c0_i32, %c0_i32_0 : i32, i32
  }
  func.func @transform_5(%arg0: i32) -> (i32, i32) {
    %c0_i32 = arith.constant 0 : i32
    %c0_i32_0 = arith.constant 0 : i32
    return %arg0, %c0_i32 : i32, i32
  }
}

</mosaic_0001>

<llo_original>
// kernel: tpu_custom_call.1
$region0: #{tpu_custom_call.1}
  #allocation0 [shape = 'u32[]', space=smem, size = 0x4, offset = 0x4, fixed_abs, tag = 'smem constant byte address 0x4 - core index']
  #allocation1 [shape = 'u32[144,128]{1,0:T(1,128)}', space=vmem, size = 0x12000, scoped, tag = 'internal scratch']
  %s0 = inlined_call_operand.hbm [shape: f32[16,32], index: 0, kind: input, shape index: {}]
  %s1 = inlined_call_operand.hbm [shape: bf16[32,128], index: 1, kind: input, shape index: {}]
  %s2 = inlined_call_operand.vmem [shape: f32[1,128], index: 2, kind: input, shape index: {}]
  %s3 = inlined_call_operand.hbm [shape: bf16[128,128], index: 3, kind: input, shape index: {}]
  %s4 = inlined_call_operand.vmem [shape: f32[1,128], index: 4, kind: input, shape index: {}]
  %s5 = inlined_call_operand.hbm [shape: f32[16,128], index: 5, kind: output, shape index: {}]
  %s6 = sld [smem:[#allocation0]]
  $region42: #{tpu_custom_call.1} parent=0
    _
  %s8 = ssub.s32 1, %s6
  %s9 = scalar_select 0, %s8, %s6
  $region1: #{tpu_custom_call.1} parent=0
    #allocation2 [shape = 'u8[8192]{0}', space=vmem, size = 0x2000, scoped, tag = 'input window, operand 0, single buffered']
    #allocation3 [shape = 's32[1]{0}', space=sflag, size = 0x4, scoped, tag = 'scoped memory for tpu_custom_call.1']
    #allocation4 [shape = 's32[1]{0}', space=sflag, size = 0x4, scoped, tag = 'scoped memory for tpu_custom_call.1']
    #allocation5 [shape = 'u8[8192]{0}', space=vmem, size = 0x2000, scoped, tag = 'input window, operand 1, single buffered']
    #allocation6 [shape = 's32[1]{0}', space=sflag, size = 0x4, scoped, tag = 'scoped memory for tpu_custom_call.1']
    #allocation7 [shape = 'u8[32768]{0}', space=vmem, size = 0x8000, scoped, tag = 'input window, operand 3, single buffered']
    #allocation8 [shape = 'u8[8192]{0}', space=vmem, size = 0x2000, scoped, tag = 'output window, operand 0, single buffered']
    %10 = vsyncpa [#allocation3], 0
    %11 = vsyncpa [#allocation6], 0
    %12 = vsyncpa [#allocation4], 0
    // Predicated region
    $region2: #{tpu_custom_call.1} parent=1 // pred_check
      _
    $region3: #{tpu_custom_call.1} parent=1 // pred_check_branch
      %14 = sbr.rel (0) target = $region5
    $region4: #{tpu_custom_call.1} parent=1 // pred_region
      %s16 = ssub.s32 256, 256
      %17 = vsyncadd [#allocation3], %s16
      %s18 = sshll.u32 [#allocation2], 4
      %s19 = int_to_ptr.vmem [resolvable:$true] %s18
      %24 = dma.hbm_to_vmem [thread:$0]  %s0, 256, %s19, [#allocation3], 128, 128, 8
    $region5: #{tpu_custom_call.1} parent=1 // pred_fallthru
      _
    // Predicated region
    $region6: #{tpu_custom_call.1} parent=1 // pred_check
      _
    $region7: #{tpu_custom_call.1} parent=1 // pred_check_branch
      %26 = sbr.rel (0) target = $region9
    $region8: #{tpu_custom_call.1} parent=1 // pred_region
      %s28 = ssub.s32 256, 256
      %29 = vsyncadd [#allocation6], %s28
      %s30 = sshll.u32 [#allocation5], 4
      %s31 = int_to_ptr.vmem [resolvable:$true] %s30
      %36 = dma.hbm_to_vmem [thread:$0]  %s1, 256, %s31, [#allocation6], 64, 64, 4
    $region9: #{tpu_custom_call.1} parent=1 // pred_fallthru
      _
    // Predicated region
    $region10: #{tpu_custom_call.1} parent=1 // pred_check
      _
    $region11: #{tpu_custom_call.1} parent=1 // pred_check_branch
      %38 = sbr.rel (0) target = $region13
    $region12: #{tpu_custom_call.1} parent=1 // pred_region
      _
    $region13: #{tpu_custom_call.1} parent=1 // pred_fallthru
      _
    // Predicated region
    $region14: #{tpu_custom_call.1} parent=1 // pred_check
      _
    $region15: #{tpu_custom_call.1} parent=1 // pred_check_branch
      %40 = sbr.rel (0) target = $region17
    $region16: #{tpu_custom_call.1} parent=1 // pred_region
      %s42 = ssub.s32 1024, 1024
      %43 = vsyncadd [#allocation6], %s42
      %s44 = sshll.u32 [#allocation7], 4
      %s45 = int_to_ptr.vmem [resolvable:$true] %s44
      %50 = dma.hbm_to_vmem [thread:$0]  %s3, 1024, %s45, [#allocation6], 64, 64, 4
    $region17: #{tpu_custom_call.1} parent=1 // pred_fallthru
      _
    // Predicated region
    $region18: #{tpu_custom_call.1} parent=1 // pred_check
      _
    $region19: #{tpu_custom_call.1} parent=1 // pred_check_branch
      %52 = sbr.rel (0) target = $region21
    $region20: #{tpu_custom_call.1} parent=1 // pred_region
      _
    $region21: #{tpu_custom_call.1} parent=1 // pred_fallthru
      _
    // Predicated region
    $region22: #{tpu_custom_call.1} parent=1 // pred_check
      _
    $region23: #{tpu_custom_call.1} parent=1 // pred_check_branch
      %54 = sbr.rel (0) target = $region25
    $region24: #{tpu_custom_call.1} parent=1 // pred_region
      %55 = dma.done [#allocation3], 256
    $region25: #{tpu_custom_call.1} parent=1 // pred_fallthru
      _
    // Predicated region
    $region26: #{tpu_custom_call.1} parent=1 // pred_check
      _
    $region27: #{tpu_custom_call.1} parent=1 // pred_check_branch
      %57 = sbr.rel (0) target = $region29
    $region28: #{tpu_custom_call.1} parent=1 // pred_region
      %58 = dma.done [#allocation6], 256
    $region29: #{tpu_custom_call.1} parent=1 // pred_fallthru
      _
    // Predicated region
    $region30: #{tpu_custom_call.1} parent=1 // pred_check
      _
    $region31: #{tpu_custom_call.1} parent=1 // pred_check_branch
      %60 = sbr.rel (0) target = $region33
    $region32: #{tpu_custom_call.1} parent=1 // pred_region
      %61 = dma.done [#allocation6], 1024
    $region33: #{tpu_custom_call.1} parent=1 // pred_fallthru
      _
    %v63 = vld [vmem:[#allocation2] sm:$0xff]
    %v64 = vld [vmem:[#allocation2 + $0x8] sm:$0xff]
    %v65 = vpack.c.bf16 %v64, %v63
    %v66 = vld [vmem:[#allocation5] sm:$0xf]
    %v67 = vld [vmem:[#allocation5 + $0x4] sm:$0xf]
    %v68 = vld [vmem:[#allocation5 + $0x8] sm:$0xf]
    %v69 = vld [vmem:[#allocation5 + $0xc] sm:$0xf]
    %v70 = vld [vmem:[%s2] sm:$0x1]
    %v72 = vlaneseq
    %v73 = vshrl.u32 %v72, 7
    %v74 = vsub.s32 0, %v73
    %v75 = vrot.slane %v70, %v74
    %v81 = vunpack.c.l.b16 %v66
    %v82 = vunpack.c.l.b16 %v67
    %v83 = vunpack.c.l.b16 %v68
    %v84 = vunpack.c.l.b16 %v69
    %v85 = vpack.c.b16 %v82, %v81
    %v86 = vpack.c.b16 %v84, %v83
    %vm89 = vcmask 261120
    %v91 = vsel %vm89, %v65, 0
    %93 = vmatprep.subr.bf16.mxu0 0
    %94 = vmatpush1.bf16.msra.mxu0 %v85
    %95 = vmatprep.subr.bf16.mxu0 0
    %96 = vmatpush1.bf16.msra.mxu0 %v86
    %97 = vmatprep.subr.bf16.mxu0 0
    %98 = vmatpush1.bf16.msra.mxu0 0
    %99 = vmatprep.subr.bf16.mxu0 0
    %100 = vmatpush1.bf16.msra.mxu0 0
    %101 = vmatprep.subr.bf16.mxu0 0
    %102 = vmatpush1.bf16.msra.mxu0 0
    %103 = vmatprep.subr.bf16.mxu0 0
    %104 = vmatpush1.bf16.msra.mxu0 0
    %105 = vmatprep.subr.bf16.mxu0 0
    %106 = vmatpush1.bf16.msra.mxu0 0
    %107 = vmatprep.subr.bf16.mxu0 0
    %108 = vmatpush1.bf16.msra.mxu0 0
    %109 = vmatprep.subr.bf16.mxu0 0
    %110 = vmatpush1.bf16.msra.mxu0 0
    %111 = vmatprep.subr.bf16.mxu0 0
    %112 = vmatpush1.bf16.msra.mxu0 0
    %113 = vmatprep.subr.bf16.mxu0 0
    %114 = vmatpush1.bf16.msra.mxu0 0
    %115 = vmatprep.subr.bf16.mxu0 0
    %116 = vmatpush1.bf16.msra.mxu0 0
    %117 = vmatprep.subr.bf16.mxu0 0
    %118 = vmatpush1.bf16.msra.mxu0 0
    %119 = vmatprep.subr.bf16.mxu0 0
    %120 = vmatpush1.bf16.msra.mxu0 0
    %121 = vmatprep.subr.bf16.mxu0 0
    %122 = vmatpush1.bf16.msra.mxu0 0
    %123 = vmatprep.subr.bf16.mxu0 0
    %124 = vmatpush1.bf16.msra.mxu0 0
    %125 = vmatprep.mubr.bf16.mxu0 0
    %126 = vmatmul.mubr.bf16.gmra.mrb[0].mxu0 %v91
    %v127 = vpop.f32.mrb[0].mxu0
    %v128 = vadd.f32 %v75, %v127
    %v129 = vpop.f32.mrb[0].mxu0
    %v130 = vpop.f32.mrb[0].mxu0
    %v131 = vadd.f32 %v75, %v130
    %v132 = vpop.f32.mrb[0].mxu0
    %133 = vdwg.mxu0
    %vm134 = vcmp.gt.f32.partialorder %v128, 0.0
    %vm135 = vcmp.gt.f32.partialorder %v131, 0.0
    %v136 = vmul.f32 %v128, 0.01
    %v137 = vmul.f32 %v131, 0.01
    %v138 = vsel %vm134, %v128, %v136
    %v139 = vsel %vm135, %v131, %v137
    %v140 = vpack.c.bf16 %v139, %v138
    %v141 = vld [vmem:[#allocation7] sm:$0xf]
    %v142 = vld [vmem:[#allocation7 + $0x4] sm:$0xf]
    %v143 = vld [vmem:[#allocation7 + $0x8] sm:$0xf]
    %v144 = vld [vmem:[#allocation7 + $0xc] sm:$0xf]
    %v145 = vld [vmem:[#allocation7 + $0x10] sm:$0xf]
    %v146 = vld [vmem:[#allocation7 + $0x14] sm:$0xf]
    %v147 = vld [vmem:[#allocation7 + $0x18] sm:$0xf]
    %v148 = vld [vmem:[#allocation7 + $0x1c] sm:$0xf]
    %v149 = vld [vmem:[#allocation7 + $0x20] sm:$0xf]
    %v150 = vld [vmem:[#allocation7 + $0x24] sm:$0xf]
    %v151 = vld [vmem:[#allocation7 + $0x28] sm:$0xf]
    %v152 = vld [vmem:[#allocation7 + $0x2c] sm:$0xf]
    %v153 = vld [vmem:[#allocation7 + $0x30] sm:$0xf]
    %v154 = vld [vmem:[#allocation7 + $0x34] sm:$0xf]
    %v155 = vld [vmem:[#allocation7 + $0x38] sm:$0xf]
    %v156 = vld [vmem:[#allocation7 + $0x3c] sm:$0xf]
    %v157 = vld [vmem:[%s4] sm:$0x1]
    %v159 = vlaneseq
    %v160 = vshrl.u32 %v159, 7
    %v161 = vsub.s32 0, %v160
    %v162 = vrot.slane %v157, %v161
    %v180 = vunpack.c.l.b16 %v141
    %v181 = vunpack.c.l.b16 %v142
    %v182 = vunpack.c.l.b16 %v143
    %v183 = vunpack.c.l.b16 %v144
    %v184 = vunpack.c.l.b16 %v145
    %v185 = vunpack.c.l.b16 %v146
    %v186 = vunpack.c.l.b16 %v147
    %v187 = vunpack.c.l.b16 %v148
    %v188 = vunpack.c.l.b16 %v149
    %v189 = vunpack.c.l.b16 %v150
    %v190 = vunpack.c.l.b16 %v151
    %v191 = vunpack.c.l.b16 %v152
    %v192 = vunpack.c.l.b16 %v153
    %v193 = vunpack.c.l.b16 %v154
    %v194 = vunpack.c.l.b16 %v155
    %v195 = vunpack.c.l.b16 %v156
    %v196 = vpack.c.b16 %v181, %v180
    %v197 = vpack.c.b16 %v183, %v182
    %v198 = vpack.c.b16 %v185, %v184
    %v199 = vpack.c.b16 %v187, %v186
    %v200 = vpack.c.b16 %v189, %v188
    %v201 = vpack.c.b16 %v191, %v190
    %v202 = vpack.c.b16 %v193, %v192
    %v203 = vpack.c.b16 %v195, %v194
    %212 = vmatprep.subr.bf16.mxu0 0
    %213 = vmatpush1.bf16.msra.mxu0 %v196
    %214 = vmatprep.subr.bf16.mxu0 0
    %215 = vmatpush1.bf16.msra.mxu0 %v197
    %216 = vmatprep.subr.bf16.mxu0 0
    %217 = vmatpush1.bf16.msra.mxu0 %v198
    %218 = vmatprep.subr.bf16.mxu0 0
    %219 = vmatpush1.bf16.msra.mxu0 %v199
    %220 = vmatprep.subr.bf16.mxu0 0
    %221 = vmatpush1.bf16.msra.mxu0 %v200
    %222 = vmatprep.subr.bf16.mxu0 0
    %223 = vmatpush1.bf16.msra.mxu0 %v201
    %224 = vmatprep.subr.bf16.mxu0 0
    %225 = vmatpush1.bf16.msra.mxu0 %v202
    %226 = vmatprep.subr.bf16.mxu0 0
    %227 = vmatpush1.bf16.msra.mxu0 %v203
    %228 = vmatprep.subr.bf16.mxu0 0
    %229 = vmatpush1.bf16.msra.mxu0 0
    %230 = vmatprep.subr.bf16.mxu0 0
    %231 = vmatpush1.bf16.msra.mxu0 0
    %232 = vmatprep.subr.bf16.mxu0 0
    %233 = vmatpush1.bf16.msra.mxu0 0
    %234 = vmatprep.subr.bf16.mxu0 0
    %235 = vmatpush1.bf16.msra.mxu0 0
    %236 = vmatprep.subr.bf16.mxu0 0
    %237 = vmatpush1.bf16.msra.mxu0 0
    %238 = vmatprep.subr.bf16.mxu0 0
    %239 = vmatpush1.bf16.msra.mxu0 0
    %240 = vmatprep.subr.bf16.mxu0 0
    %241 = vmatpush1.bf16.msra.mxu0 0
    %242 = vmatprep.subr.bf16.mxu0 0
    %243 = vmatpush1.bf16.msra.mxu0 0
    %244 = vmatprep.mubr.bf16.mxu0 0
    %245 = vmatmul.mubr.bf16.gmra.mrb[0].mxu0 %v140
    %v246 = vpop.f32.mrb[0].mxu0
    %v247 = vadd.f32 %v162, %v246
    %v248 = vpop.f32.mrb[0].mxu0
    %v249 = vpop.f32.mrb[0].mxu0
    %v250 = vadd.f32 %v162, %v249
    %v251 = vpop.f32.mrb[0].mxu0
    %252 = vdwg.mxu0
    %vm253 = vcmp.gt.f32.partialorder %v247, 0.0
    %vm254 = vcmp.gt.f32.partialorder %v250, 0.0
    %v255 = vmul.f32 %v247, 0.01
    %v256 = vmul.f32 %v250, 0.01
    %v257 = vsel %vm253, %v247, %v255
    %v258 = vsel %vm254, %v250, %v256
    %259 = vst [vmem:[#allocation8] sm:$0xff] %v257
    %260 = vst [vmem:[#allocation8 + $0x8] sm:$0xff] %v258
    // Predicated region
    $region34: #{tpu_custom_call.1} parent=1 // pred_check
      _
    $region35: #{tpu_custom_call.1} parent=1 // pred_check_branch
      %262 = sbr.rel (0) target = $region37
    $region36: #{tpu_custom_call.1} parent=1 // pred_region
      %s264 = ssub.s32 256, 256
      %265 = vsyncadd [#allocation4], %s264
      %s266 = sshll.u32 [#allocation8], 4
      %s267 = int_to_ptr.vmem [resolvable:$true] %s266
      %272 = dma.vmem_to_hbm [thread:$0]  %s267, 256, %s5, [#allocation4], 128, 128, 8
    $region37: #{tpu_custom_call.1} parent=1 // pred_fallthru
      _
    // Predicated region
    $region38: #{tpu_custom_call.1} parent=1 // pred_check
      _
    $region39: #{tpu_custom_call.1} parent=1 // pred_check_branch
      %274 = sbr.rel (0) target = $region41
    $region40: #{tpu_custom_call.1} parent=1 // pred_region
      %275 = dma.done [#allocation4], 256
    $region41: #{tpu_custom_call.1} parent=1 // pred_fallthru
      _
    %276 = vsyncpa [#allocation3], 1
    %277 = vsyncpa [#allocation6], 1
    %278 = vsyncpa [#allocation4], 1

</llo_original>
